<compile_context>
chip_gen: v6e
topology: v6e:2x2x1
jax: 0.10.0
libtpu: 0.0.40
codegen_flags: <defaults>
</compile_context>

<pallas_src>
import math
import functools

import jax
import jax.numpy as jnp
from jax import lax
from jax.experimental import pallas as pl
from jax.experimental.pallas import tpu as pltpu


# ----------------------------------------------------------------------------
# helpers
# ----------------------------------------------------------------------------
def _round_up(x, m):
    return ((x + m - 1) // m) * m


def _pick_tile(m, max_tile=512):
    """Row-tile size for the projection kernels."""
    if m <= max_tile:
        return m
    for c in (512, 384, 256, 128):
        if m % c == 0:
            return c
    # Non-dividing tail: rely on pl.cdiv grid + Pallas boundary masking.
    return 256


def _vmem_capacity_bytes():
    try:
        return int(pltpu.get_tpu_info().vmem_capacity_bytes)
    except Exception:
        return 64 * 1024 * 1024          # conservative: v7x per-TensorCore VMEM


def _attention_group_size(n_slices, L, dk, vmem_budget, min_steps=4):
    """Largest divisor of n_slices fitting vmem_budget with >= min_steps grid steps."""
    ls = _round_up(L, 8)                 # sublane padding
    ll = _round_up(L, 128)               # lane padding
    dl = _round_up(dk, 128)
    # f32 bytes per slice:
    #   pipelined (double-buffered): sigma (ls,128), q/k/v (ls,dl),
    #                                prior/series (ls,ll), out (ls,dl)
    #   temporaries (single buffer): kw, w, e, p  ~ 4 x (ls,ll)
    pipelined = 4 * (128 * ls + 4 * ls * dl + 2 * ls * ll)
    temps = 4 * 4 * ls * ll
    per_slice = 2 * pipelined + temps
    resident = 4 * ls * ll               # -(|i-j|^2), fetched once
    cap = max(1, (vmem_budget - resident) // per_slice)
    cap = min(cap, max(1, n_slices // min_steps))   # keep pipelining / megacore busy
    g = 1
    for c in range(1, n_slices + 1):
        if n_slices % c == 0 and c <= cap:
            g = c
    return g


# ----------------------------------------------------------------------------
# Per-head projection:  out[s] = X @ W[s].T  with head-grouped weights (S, d, H).
# Grid only over row tiles; the full weight is a constant-index VMEM-resident
# block, so X is read from HBM exactly once.  Output layout (S, B*L, d) is the
# "torch.cat(split(...), dim=0)" layout (free reshape to (S*B, L, d)).
# ----------------------------------------------------------------------------
def _head_proj_kernel(x_ref, w_ref, o_ref, *, n_heads, compute_dtype):
    x = x_ref[...].astype(compute_dtype)
    for s in range(n_heads):             # static loop; weights already resident
        o_ref[s] = lax.dot_general(
            x, w_ref[s].astype(compute_dtype),
            dimension_numbers=(((1,), (1,)), ((), ())),     # contract H with H (trans_b)
            preferred_element_type=jnp.float32).astype(o_ref.dtype)


def head_projection(x, w_heads, compute_dtype, out_dtype):
    M, K = x.shape
    S, N, K2 = w_heads.shape
    assert K == K2
    tm = _pick_tile(M)
    kernel = functools.partial(_head_proj_kernel, n_heads=S,
                               compute_dtype=compute_dtype)
    return pl.pallas_call(
        kernel,
        out_shape=jax.ShapeDtypeStruct((S, M, N), out_dtype),
        grid=(pl.cdiv(M, tm),),
        in_specs=[
            pl.BlockSpec((tm, K), lambda m: (m, 0)),         # X tile: streamed once
            pl.BlockSpec((S, N, K), lambda m: (0, 0, 0)),    # full weight, resident
        ],
        out_specs=pl.BlockSpec((S, tm, N), lambda m: (0, m, 0)),
        compiler_params=pltpu.CompilerParams(
            dimension_semantics=("parallel",)),
    )(x, w_heads)


# ----------------------------------------------------------------------------
# Output projection:  y = sum_s  out_h[s] @ W_out[:, s*dk:(s+1)*dk].T
# Head-merge + final Linear fused; heads accumulated in-kernel in f32 and
# written straight to y_ref (no reduction grid axis, no scratch accumulator).
# ----------------------------------------------------------------------------
def _out_proj_kernel(oh_ref, w_ref, y_ref, *, n_heads, compute_dtype):
    acc = jnp.zeros(y_ref.shape, jnp.float32)
    for s in range(n_heads):
        acc = acc + lax.dot_general(
            oh_ref[s].astype(compute_dtype), w_ref[s].astype(compute_dtype),
            dimension_numbers=(((1,), (1,)), ((), ())),      # contract dk with dk
            preferred_element_type=jnp.float32)
    y_ref[...] = acc.astype(y_ref.dtype)


def head_output_projection(out_heads, w_out_heads, compute_dtype):
    S, M, dk = out_heads.shape
    S2, H, dk2 = w_out_heads.shape
    assert S == S2 and dk == dk2
    tm = _pick_tile(M)
    kernel = functools.partial(_out_proj_kernel, n_heads=S,
                               compute_dtype=compute_dtype)
    return pl.pallas_call(
        kernel,
        out_shape=jax.ShapeDtypeStruct((M, H), jnp.float32),
        grid=(pl.cdiv(M, tm),),
        in_specs=[
            pl.BlockSpec((S, tm, dk), lambda m: (0, m, 0)),
            pl.BlockSpec((S, H, dk), lambda m: (0, 0, 0)),   # full weight, resident
        ],
        out_specs=pl.BlockSpec((tm, H), lambda m: (m, 0)),
        compiler_params=pltpu.CompilerParams(
            dimension_semantics=("parallel",)),
    )(out_heads, w_out_heads)


# ----------------------------------------------------------------------------
# AnomalyAttention kernel: gb (head*batch) slices per grid step.
# ----------------------------------------------------------------------------
def _attn_kernel(ndist_ref, sigma_ref, q_ref, k_ref, v_ref,
                 prior_ref, series_ref, out_ref):
    neg_dist_sq = ndist_ref[...]                      # (L, L), resident across steps
    sigma = sigma_ref[...]                            # (gb, L, 1), f32

    # --- prior association: Gaussian kernel over |i-j|, row-normalised.
    # The 1/(sqrt(2*pi)*sigma) prefactor is constant per row and cancels exactly
    # in the normalisation, so it is dropped.
    inv_two_sigma_sq = 1.0 / (2.0 * sigma * sigma)
    kw = jnp.exp(neg_dist_sq[None, :, :] * inv_two_sigma_sq)           # (gb, L, L)
    row_sum = jnp.sum(kw, axis=2, keepdims=True)
    prior_ref[...] = (kw * pl.reciprocal(row_sum, approx=True)).astype(prior_ref.dtype)

    # --- series association: softmax(Q K^T / sqrt(dk)); 1/sqrt(dk) is folded
    # into W_q in the wrapper.  Transposed-RHS contraction, f32 accumulation.
    w = jnp.einsum("gqd,gkd->gqk", q_ref[...], k_ref[...],
                   preferred_element_type=jnp.float32)                 # (gb, L, L)
    m = jnp.max(w, axis=2, keepdims=True)
    e = jnp.exp(w - m)
    p = e * pl.reciprocal(jnp.sum(e, axis=2, keepdims=True), approx=True)
    series_ref[...] = p.astype(series_ref.dtype)

    # --- attention output.
    out_ref[...] = jnp.einsum("gqk,gkd->gqd", p.astype(v_ref.dtype), v_ref[...],
                              preferred_element_type=jnp.float32).astype(out_ref.dtype)


def pallas_anomaly_attention(neg_dist_sq, sigma, q, k, v, dk, *,
                             assoc_dtype=jnp.float32):
    SB, L, _ = q.shape
    vmem_cap = _vmem_capacity_bytes()
    vmem_limit = min(int(vmem_cap * 0.375), 96 * 1024 * 1024)
    gb = _attention_group_size(SB, L, dk, int(vmem_limit * 0.85))
    return pl.pallas_call(
        _attn_kernel,
        out_shape=(
            jax.ShapeDtypeStruct((SB, L, L), assoc_dtype),   # prior association
            jax.ShapeDtypeStruct((SB, L, L), assoc_dtype),   # series association
            jax.ShapeDtypeStruct((SB, L, dk), jnp.float32),  # attention output
        ),
        grid=(SB // gb,),
        in_specs=[
            pl.BlockSpec((L, L), lambda g: (0, 0)),          # constant index: fetched once
            pl.BlockSpec((gb, L, 1), lambda g: (g, 0, 0)),
            pl.BlockSpec((gb, L, dk), lambda g: (g, 0, 0)),
            pl.BlockSpec((gb, L, dk), lambda g: (g, 0, 0)),
            pl.BlockSpec((gb, L, dk), lambda g: (g, 0, 0)),
        ],
        out_specs=(
            pl.BlockSpec((gb, L, L), lambda g: (g, 0, 0)),
            pl.BlockSpec((gb, L, L), lambda g: (g, 0, 0)),
            pl.BlockSpec((gb, L, dk), lambda g: (g, 0, 0)),
        ),
        compiler_params=pltpu.CompilerParams(
            dimension_semantics=("parallel",),
            vmem_limit_bytes=vmem_limit),
    )(neg_dist_sq, sigma, q, k, v)


# ----------------------------------------------------------------------------
# MultiHead forward (glue in plain JAX, hot paths in the Pallas kernels above).
# ----------------------------------------------------------------------------
def multihead_forward(params, Sigma, Q, K, V, *,
                      compute_dtype=jnp.bfloat16, assoc_dtype=jnp.float32):
    B, L, H = Q.shape
    S = params["n_splits"]
    dk = H // S
    BL = B * L

    # Head-grouped weight views (weight-only reshapes + one tiny transpose).
    # The 1/sqrt(dk) softmax scale is folded into W_q once (weight-only).
    w_q_h = (params["W_q"] * (1.0 / math.sqrt(dk))).reshape(S, dk, H)
    w_k_h = params["W_k"].reshape(S, dk, H)
    w_v_h = params["W_v"].reshape(S, dk, H)
    w_out_h = params["W_out"].reshape(H, S, dk).transpose(1, 0, 2)     # (S, H, dk)

    # sigma projection: per-head output width is 1 lane -> pathological Pallas
    # stores; do it as one tiny lane-dense XLA matmul + transpose instead.
    sp = Sigma.reshape(BL, H) @ params["W_sigma"].T                    # (BL, S)
    sh = sp.reshape(B, L, S).transpose(2, 0, 1).reshape(S * B, L, 1)

    # q/k/v projections produced directly in torch.cat(split(...), dim=0)
    # layout: (S, B*L, dk) reshapes for free into (S*B, L, dk).
    qh = head_projection(Q.reshape(BL, H), w_q_h, compute_dtype,
                         compute_dtype).reshape(S * B, L, dk)
    kh = head_projection(K.reshape(BL, H), w_k_h, compute_dtype,
                         compute_dtype).reshape(S * B, L, dk)
    vh = head_projection(V.reshape(BL, H), w_v_h, compute_dtype,
                         compute_dtype).reshape(S * B, L, dk)

    # -(|i-j|^2): computed once here, stays VMEM-resident inside the kernel.
    idx = jnp.arange(L, dtype=jnp.float32)
    diff = idx[:, None] - idx[None, :]
    neg_dist_sq = -(diff * diff)

    prior, series, out_h = pallas_anomaly_attention(
        neg_dist_sq, sh, qh, kh, vh, dk, assoc_dtype=assoc_dtype)

    # Head merge + final Linear, fused (no activation transpose back through HBM).
    out = head_output_projection(out_h.reshape(S, BL, dk), w_out_h,
                                 compute_dtype).reshape(B, L, H)
    return prior, series, out


# ----------------------------------------------------------------------------
# Pure-JAX reference (PyTorch semantics) for correctness checking.
# ----------------------------------------------------------------------------
def reference_forward(params, Sigma, Q, K, V):
    B, L, H = Q.shape
    S = params["n_splits"]
    dk = H // S
    sp = Sigma @ params["W_sigma"].T
    qp = Q @ params["W_q"].T
    kp = K @ params["W_k"].T
    vp = V @ params["W_v"].T

    def to_heads(x, d):
        return x.reshape(B, L, S, d).transpose(2, 0, 1, 3).reshape(S * B, L, d)

    sh = to_heads(sp, 1)
    qh = to_heads(qp, dk)
    kh = to_heads(kp, dk)
    vh = to_heads(vp, dk)

    idx = jnp.arange(L, dtype=jnp.float32)
    dist = jnp.abs(idx[:, None] - idx[None, :])[None]
    kw = 1.0 / (math.sqrt(2.0 * math.pi) * sh) * jnp.exp(-dist ** 2 / (2.0 * sh ** 2))
    prior = kw / jnp.sum(kw, axis=2, keepdims=True)

    w = jnp.einsum("bld,bmd->blm", qh, kh) / math.sqrt(dk)
    series = jax.nn.softmax(w, axis=2)
    out = jnp.einsum("blm,bmd->bld", series, vh)
    out = out.reshape(S, B, L, dk).transpose(1, 2, 0, 3).reshape(B, L, H)
    out = out @ params["W_out"].T
    return prior, series, out


if __name__ == "__main__":
    B, L, H, S = 2, 8, 32, 4      # batch, seq, hidden_size, n_splits

    key = jax.random.PRNGKey(0)
    ks = jax.random.split(key, 9)
    Sigma = jax.random.normal(ks[0], (B, L, H), jnp.float32)
    Q = jax.random.normal(ks[1], (B, L, H), jnp.float32)
    K = jax.random.normal(ks[2], (B, L, H), jnp.float32)
    V = jax.random.normal(ks[3], (B, L, H), jnp.float32)

    scale = 1.0 / math.sqrt(H)
    params = {
        "n_splits": S,
        # nn.Linear weights are (out_features, in_features), bias=False
        "W_sigma": jax.random.normal(ks[4], (S, H), jnp.float32) * scale,
        "W_q": jax.random.normal(ks[5], (H, H), jnp.float32) * scale,
        "W_k": jax.random.normal(ks[6], (H, H), jnp.float32) * scale,
        "W_v": jax.random.normal(ks[7], (H, H), jnp.float32) * scale,
        "W_out": jax.random.normal(ks[8], (H, H), jnp.float32) * scale,
    }

    prior, series, out = multihead_forward(params, Sigma, Q, K, V)
    jax.block_until_ready((prior, series, out))

    rp, rs, ro = reference_forward(params, Sigma, Q, K, V)
    assert prior.shape == (S * B, L, L) and series.shape == (S * B, L, L)
    assert out.shape == (B, L, H)
    # prior: f32 exp + approx reciprocal only.
    # series/out: bf16 MXU inputs (f32 accumulation) + approx reciprocal.
    assert jnp.allclose(prior, rp, atol=2e-3, rtol=2e-3)
    assert jnp.allclose(series, rs, atol=1e-2, rtol=1e-2)
    assert jnp.allclose(out, ro, atol=2e-2, rtol=2e-2)

    print("KERNEL_OK")
</pallas_src>

<mosaic_0001>
module attributes {stable_mosaic.version = 11 : i64} {
  func.func @_head_proj_kernel(%arg0: i32, %arg1: memref<16x32xf32, #tpu.memory_space<vmem>>, %arg2: memref<4x8x32xf32, #tpu.memory_space<vmem>>, %arg3: memref<4x16x8xbf16, #tpu.memory_space<vmem>>) attributes {dimension_semantics = [#tpu.dimension_semantics<parallel>], iteration_bounds = array<i64: 1>, scalar_prefetch = 0 : i64, scratch_operands = 0 : i64, tpu.core_type = #tpu.core_type<tc>, window_params = [{transform_indices = @transform_0, window_bounds = array<i64: 16, 32>}, {pipeline_mode = #tpu.pipeline_mode<synchronous>, transform_indices = @transform_1, window_bounds = array<i64: 4, 8, 32>}, {transform_indices = @transform_2, window_bounds = array<i64: 4, 16, 8>}]} {
    %c0 = arith.constant 0 : index
    %c0_0 = arith.constant 0 : index
    %0 = vector.load %arg1[%c0, %c0_0] : memref<16x32xf32, #tpu.memory_space<vmem>>, vector<16x32xf32>
    %1 = arith.truncf %0 : vector<16x32xf32> to vector<16x32xbf16>
    %c0_1 = arith.constant 0 : index
    %c0_2 = arith.constant 0 : index
    %c0_3 = arith.constant 0 : index
    %2 = vector.load %arg2[%c0_1, %c0_2, %c0_3] : memref<4x8x32xf32, #tpu.memory_space<vmem>>, vector<1x8x32xf32>
    %3 = vector.shape_cast %2 : vector<1x8x32xf32> to vector<8x32xf32>
    %4 = arith.truncf %3 : vector<8x32xf32> to vector<8x32xbf16>
    %cst = arith.constant dense<0.000000e+00> : vector<16x8xf32>
    %5 = tpu.matmul %1, %4, %cst {dimension_numbers = #tpu.dot_dimension_numbers<[1], [1], [0], [0], [0, 0, 1, 0], [], []>} : vector<16x32xbf16>, vector<8x32xbf16>, vector<16x8xf32> -> vector<16x8xf32>
    %6 = arith.truncf %5 : vector<16x8xf32> to vector<16x8xbf16>
    %c0_4 = arith.constant 0 : index
    %c0_5 = arith.constant 0 : index
    %c0_6 = arith.constant 0 : index
    %7 = vector.load %arg3[%c0_4, %c0_5, %c0_6] : memref<4x16x8xbf16, #tpu.memory_space<vmem>>, vector<1x16x8xbf16>
    %8 = vector.shape_cast %7 : vector<1x16x8xbf16> to vector<16x8xbf16>
    %9 = vector.shape_cast %6 : vector<16x8xbf16> to vector<1x16x8xbf16>
    tpu.vector_store %arg3[%c0_4, %c0_5, %c0_6], %9 {strides = array<i32>} : memref<4x16x8xbf16, #tpu.memory_space<vmem>>, vector<1x16x8xbf16>,
    %c1 = arith.constant 1 : index
    %c0_7 = arith.constant 0 : index
    %c0_8 = arith.constant 0 : index
    %10 = vector.load %arg2[%c1, %c0_7, %c0_8] : memref<4x8x32xf32, #tpu.memory_space<vmem>>, vector<1x8x32xf32>
    %11 = vector.shape_cast %10 : vector<1x8x32xf32> to vector<8x32xf32>
    %12 = arith.truncf %11 : vector<8x32xf32> to vector<8x32xbf16>
    %cst_9 = arith.constant dense<0.000000e+00> : vector<16x8xf32>
    %13 = tpu.matmul %1, %12, %cst_9 {dimension_numbers = #tpu.dot_dimension_numbers<[1], [1], [0], [0], [0, 0, 1, 0], [], []>} : vector<16x32xbf16>, vector<8x32xbf16>, vector<16x8xf32> -> vector<16x8xf32>
    %14 = arith.truncf %13 : vector<16x8xf32> to vector<16x8xbf16>
    %c1_10 = arith.constant 1 : index
    %c0_11 = arith.constant 0 : index
    %c0_12 = arith.constant 0 : index
    %15 = vector.load %arg3[%c1_10, %c0_11, %c0_12] : memref<4x16x8xbf16, #tpu.memory_space<vmem>>, vector<1x16x8xbf16>
    %16 = vector.shape_cast %15 : vector<1x16x8xbf16> to vector<16x8xbf16>
    %17 = vector.shape_cast %14 : vector<16x8xbf16> to vector<1x16x8xbf16>
    tpu.vector_store %arg3[%c1_10, %c0_11, %c0_12], %17 {strides = array<i32>} : memref<4x16x8xbf16, #tpu.memory_space<vmem>>, vector<1x16x8xbf16>,
    %c2 = arith.constant 2 : index
    %c0_13 = arith.constant 0 : index
    %c0_14 = arith.constant 0 : index
    %18 = vector.load %arg2[%c2, %c0_13, %c0_14] : memref<4x8x32xf32, #tpu.memory_space<vmem>>, vector<1x8x32xf32>
    %19 = vector.shape_cast %18 : vector<1x8x32xf32> to vector<8x32xf32>
    %20 = arith.truncf %19 : vector<8x32xf32> to vector<8x32xbf16>
    %cst_15 = arith.constant dense<0.000000e+00> : vector<16x8xf32>
    %21 = tpu.matmul %1, %20, %cst_15 {dimension_numbers = #tpu.dot_dimension_numbers<[1], [1], [0], [0], [0, 0, 1, 0], [], []>} : vector<16x32xbf16>, vector<8x32xbf16>, vector<16x8xf32> -> vector<16x8xf32>
    %22 = arith.truncf %21 : vector<16x8xf32> to vector<16x8xbf16>
    %c2_16 = arith.constant 2 : index
    %c0_17 = arith.constant 0 : index
    %c0_18 = arith.constant 0 : index
    %23 = vector.load %arg3[%c2_16, %c0_17, %c0_18] : memref<4x16x8xbf16, #tpu.memory_space<vmem>>, vector<1x16x8xbf16>
    %24 = vector.shape_cast %23 : vector<1x16x8xbf16> to vector<16x8xbf16>
    %25 = vector.shape_cast %22 : vector<16x8xbf16> to vector<1x16x8xbf16>
    tpu.vector_store %arg3[%c2_16, %c0_17, %c0_18], %25 {strides = array<i32>} : memref<4x16x8xbf16, #tpu.memory_space<vmem>>, vector<1x16x8xbf16>,
    %c3 = arith.constant 3 : index
    %c0_19 = arith.constant 0 : index
    %c0_20 = arith.constant 0 : index
    %26 = vector.load %arg2[%c3, %c0_19, %c0_20] : memref<4x8x32xf32, #tpu.memory_space<vmem>>, vector<1x8x32xf32>
    %27 = vector.shape_cast %26 : vector<1x8x32xf32> to vector<8x32xf32>
    %28 = arith.truncf %27 : vector<8x32xf32> to vector<8x32xbf16>
    %cst_21 = arith.constant dense<0.000000e+00> : vector<16x8xf32>
    %29 = tpu.matmul %1, %28, %cst_21 {dimension_numbers = #tpu.dot_dimension_numbers<[1], [1], [0], [0], [0, 0, 1, 0], [], []>} : vector<16x32xbf16>, vector<8x32xbf16>, vector<16x8xf32> -> vector<16x8xf32>
    %30 = arith.truncf %29 : vector<16x8xf32> to vector<16x8xbf16>
    %c3_22 = arith.constant 3 : index
    %c0_23 = arith.constant 0 : index
    %c0_24 = arith.constant 0 : index
    %31 = vector.load %arg3[%c3_22, %c0_23, %c0_24] : memref<4x16x8xbf16, #tpu.memory_space<vmem>>, vector<1x16x8xbf16>
    %32 = vector.shape_cast %31 : vector<1x16x8xbf16> to vector<16x8xbf16>
    %33 = vector.shape_cast %30 : vector<16x8xbf16> to vector<1x16x8xbf16>
    tpu.vector_store %arg3[%c3_22, %c0_23, %c0_24], %33 {strides = array<i32>} : memref<4x16x8xbf16, #tpu.memory_space<vmem>>, vector<1x16x8xbf16>,
    return
  }
  func.func @transform_0(%arg0: i32) -> (i32, i32) {
    %c0_i32 = arith.constant 0 : i32
    %c0_i32_0 = arith.constant 0 : i32
    return %arg0, %c0_i32 : i32, i32
  }
  func.func @transform_1(%arg0: i32) -> (i32, i32, i32) {
    %c0_i32 = arith.constant 0 : i32
    %c0_i32_0 = arith.constant 0 : i32
    %c0_i32_1 = arith.constant 0 : i32
    %c0_i32_2 = arith.constant 0 : i32
    return %c0_i32, %c0_i32_0, %c0_i32_1 : i32, i32, i32
  }
  func.func @transform_2(%arg0: i32) -> (i32, i32, i32) {
    %c0_i32 = arith.constant 0 : i32
    %c0_i32_0 = arith.constant 0 : i32
    %c0_i32_1 = arith.constant 0 : i32
    return %c0_i32, %arg0, %c0_i32_0 : i32, i32, i32
  }
}

</mosaic_0001>

<llo_original>
// kernel: tpu_custom_call.1
$region0: #{tpu_custom_call.1}
  #allocation0 [shape = 'u32[]', space=smem, size = 0x4, offset = 0x4, fixed_abs, tag = 'smem constant byte address 0x4 - core index']
  #allocation1 [shape = 'u32[144,128]{1,0:T(1,128)}', space=vmem, size = 0x12000, scoped, tag = 'internal scratch']
  %s0 = inlined_call_operand.hbm [shape: f32[16,32], index: 0, kind: input, shape index: {}]
  %s1 = inlined_call_operand.hbm [shape: f32[4,8,32], index: 1, kind: input, shape index: {}]
  %s2 = inlined_call_operand.vmem [shape: bf16[4,16,8], index: 2, kind: output, shape index: {}]
  %s3 = sld [smem:[#allocation0]]
  $region26: #{tpu_custom_call.1} parent=0
    _
  %s5 = ssub.s32 1, %s3
  %s6 = scalar_select 0, %s5, %s3
  $region1: #{tpu_custom_call.1} parent=0
    #allocation2 [shape = 'u8[8192]{0}', space=vmem, size = 0x2000, scoped, tag = 'input window, operand 0, single buffered']
    #allocation3 [shape = 's32[1]{0}', space=sflag, size = 0x4, scoped, tag = 'scoped memory for tpu_custom_call.1']
    #allocation4 [shape = 'u8[16384]{0}', space=vmem, size = 0x4000, scoped, tag = 'input window, operand 1, single buffered']
    #allocation5 [shape = 's32[1]{0}', space=sflag, size = 0x4, scoped, tag = 'scoped memory for tpu_custom_call.1']
    %7 = vsyncpa [#allocation3], 0
    %8 = vsyncpa [#allocation5], 0
    // Predicated region
    $region2: #{tpu_custom_call.1} parent=1 // pred_check
      _
    $region3: #{tpu_custom_call.1} parent=1 // pred_check_branch
      %10 = sbr.rel (0) target = $region5
    $region4: #{tpu_custom_call.1} parent=1 // pred_region
      %s12 = ssub.s32 256, 256
      %13 = vsyncadd [#allocation3], %s12
      %s14 = sshll.u32 [#allocation2], 4
      %s15 = int_to_ptr.vmem [resolvable:$true] %s14
      %20 = dma.hbm_to_vmem [thread:$0]  %s0, 256, %s15, [#allocation3], 128, 128, 8
    $region5: #{tpu_custom_call.1} parent=1 // pred_fallthru
      _
    // Predicated region
    $region6: #{tpu_custom_call.1} parent=1 // pred_check
      _
    $region7: #{tpu_custom_call.1} parent=1 // pred_check_branch
      %22 = sbr.rel (0) target = $region9
    $region8: #{tpu_custom_call.1} parent=1 // pred_region
      %s24 = ssub.s32 512, 512
      %25 = vsyncadd [#allocation5], %s24
      %s26 = sshll.u32 [#allocation4], 4
      %s27 = int_to_ptr.vmem [resolvable:$true] %s26
      %32 = dma.hbm_to_vmem [thread:$0]  %s1, 512, %s27, [#allocation5], 128, 128, 8
    $region9: #{tpu_custom_call.1} parent=1 // pred_fallthru
      _
    // Predicated region
    $region10: #{tpu_custom_call.1} parent=1 // pred_check
      _
    $region11: #{tpu_custom_call.1} parent=1 // pred_check_branch
      %34 = sbr.rel (0) target = $region13
    $region12: #{tpu_custom_call.1} parent=1 // pred_region
      %35 = dma.done [#allocation3], 256
    $region13: #{tpu_custom_call.1} parent=1 // pred_fallthru
      _
    // Predicated region
    $region14: #{tpu_custom_call.1} parent=1 // pred_check
      _
    $region15: #{tpu_custom_call.1} parent=1 // pred_check_branch
      %37 = sbr.rel (0) target = $region17
    $region16: #{tpu_custom_call.1} parent=1 // pred_region
      %38 = dma.done [#allocation5], 512
    $region17: #{tpu_custom_call.1} parent=1 // pred_fallthru
      _
    %v40 = vld [vmem:[#allocation2] sm:$0xff]
    %v41 = vld [vmem:[#allocation2 + $0x8] sm:$0xff]
    %v42 = vpack.c.bf16 %v41, %v40
    %v43 = vld [vmem:[#allocation4] sm:$0xff]
    %v44 = vpack.c.bf16 %v43, %v43
    %vm45 = vcmask 261120
    %v47 = vsel %vm45, %v42, 0
    %v50 = vsel %vm45, %v44, 0
    %52 = vmatprep.subr.bf16.mxu0 0
    %53 = vmatpush1.bf16.xpose.msra.mxu0 0
    %54 = vmatprep.subr.bf16.mxu0 0
    %55 = vmatpush1.bf16.xpose.msra.mxu0 0
    %56 = vmatprep.subr.bf16.mxu0 0
    %57 = vmatpush1.bf16.xpose.msra.mxu0 0
    %58 = vmatprep.subr.bf16.mxu0 0
    %59 = vmatpush1.bf16.xpose.msra.mxu0 0
    %60 = vmatprep.subr.bf16.mxu0 0
    %61 = vmatpush1.bf16.xpose.msra.mxu0 0
    %62 = vmatprep.subr.bf16.mxu0 0
    %63 = vmatpush1.bf16.xpose.msra.mxu0 0
    %64 = vmatprep.subr.bf16.mxu0 0
    %65 = vmatpush1.bf16.xpose.msra.mxu0 0
    %66 = vmatprep.subr.bf16.mxu0 0
    %67 = vmatpush1.bf16.xpose.msra.mxu0 %v50
    %68 = vmatprep.subr.bf16.mxu0 0
    %69 = vmatpush2.bf16.xpose.msra.mxu0 0
    %70 = vmatprep.subr.bf16.mxu0 0
    %71 = vmatpush2.bf16.xpose.msra.mxu0 0
    %72 = vmatprep.subr.bf16.mxu0 0
    %73 = vmatpush2.bf16.xpose.msra.mxu0 0
    %74 = vmatprep.subr.bf16.mxu0 0
    %75 = vmatpush2.bf16.xpose.msra.mxu0 0
    %76 = vmatprep.subr.bf16.mxu0 0
    %77 = vmatpush2.bf16.xpose.msra.mxu0 0
    %78 = vmatprep.subr.bf16.mxu0 0
    %79 = vmatpush2.bf16.xpose.msra.mxu0 0
    %80 = vmatprep.subr.bf16.mxu0 0
    %81 = vmatpush2.bf16.xpose.msra.mxu0 0
    %82 = vmatprep.subr.bf16.mxu0 0
    %83 = vmatpush2.bf16.xpose.msra.mxu0 0
    %84 = vmatprep.mubr.bf16.mxu0 0
    %85 = vmatmul.mubr.bf16.gmra.mxu0 %v47
    %v86 = vpop.f32.mrf.mxu0
    %v87 = vadd.f32 0.0, %v86
    %v88 = vpop.f32.mrf.mxu0
    %v89 = vpop.f32.mrf.mxu0
    %v90 = vadd.f32 0.0, %v89
    %v91 = vpop.f32.mrf.mxu0
    %92 = vdwg.mxu0
    %v93 = vpack.c.bf16 %v90, %v87
    %v95 = vunpack.c.l.b16 %v93
    %v96 = vunpack.c.h.b16 %v93
    %v97 = vpack.c.b16 %v95, %v95
    %v98 = vpack.c.b16 %v96, %v96
    %vm101 = vcmask 60416
    %102 = vst.msk [vmem:[%s2] sm:$0xf] %vm101, %v97
    %103 = vst.msk [vmem:[%s2 + $0x4] sm:$0xf] %vm101, %v98
    %s104 = scalar_lea.vmem [#allocation4], 8
    %v105 = vld [vmem:[%s104] sm:$0xff]
    %v106 = vpack.c.bf16 %v105, %v105
    %v108 = vsel %vm45, %v106, 0
    %110 = vmatprep.subr.bf16.mxu0 0
    %111 = vmatpush1.bf16.xpose.msra.mxu0 0
    %112 = vmatprep.subr.bf16.mxu0 0
    %113 = vmatpush1.bf16.xpose.msra.mxu0 0
    %114 = vmatprep.subr.bf16.mxu0 0
    %115 = vmatpush1.bf16.xpose.msra.mxu0 0
    %116 = vmatprep.subr.bf16.mxu0 0
    %117 = vmatpush1.bf16.xpose.msra.mxu0 0
    %118 = vmatprep.subr.bf16.mxu0 0
    %119 = vmatpush1.bf16.xpose.msra.mxu0 0
    %120 = vmatprep.subr.bf16.mxu0 0
    %121 = vmatpush1.bf16.xpose.msra.mxu0 0
    %122 = vmatprep.subr.bf16.mxu0 0
    %123 = vmatpush1.bf16.xpose.msra.mxu0 0
    %124 = vmatprep.subr.bf16.mxu0 0
    %125 = vmatpush1.bf16.xpose.msra.mxu0 %v108
    %126 = vmatprep.subr.bf16.mxu0 0
    %127 = vmatpush2.bf16.xpose.msra.mxu0 0
    %128 = vmatprep.subr.bf16.mxu0 0
    %129 = vmatpush2.bf16.xpose.msra.mxu0 0
    %130 = vmatprep.subr.bf16.mxu0 0
    %131 = vmatpush2.bf16.xpose.msra.mxu0 0
    %132 = vmatprep.subr.bf16.mxu0 0
    %133 = vmatpush2.bf16.xpose.msra.mxu0 0
    %134 = vmatprep.subr.bf16.mxu0 0
    %135 = vmatpush2.bf16.xpose.msra.mxu0 0
    %136 = vmatprep.subr.bf16.mxu0 0
    %137 = vmatpush2.bf16.xpose.msra.mxu0 0
    %138 = vmatprep.subr.bf16.mxu0 0
    %139 = vmatpush2.bf16.xpose.msra.mxu0 0
    %140 = vmatprep.subr.bf16.mxu0 0
    %141 = vmatpush2.bf16.xpose.msra.mxu0 0
    %142 = vmatprep.mubr.bf16.mxu0 0
    %143 = vmatmul.mubr.bf16.gmra.mxu0 %v47
    %v144 = vpop.f32.mrf.mxu0
    %v145 = vadd.f32 0.0, %v144
    %v146 = vpop.f32.mrf.mxu0
    %v147 = vpop.f32.mrf.mxu0
    %v148 = vadd.f32 0.0, %v147
    %v149 = vpop.f32.mrf.mxu0
    %150 = vdwg.mxu0
    %v151 = vpack.c.bf16 %v148, %v145
    %v153 = vunpack.c.l.b16 %v151
    %v154 = vunpack.c.h.b16 %v151
    %v155 = vpack.c.b16 %v153, %v153
    %v156 = vpack.c.b16 %v154, %v154
    %s159 = scalar_lea.vmem %s2, 8
    %160 = vst.msk [vmem:[%s159] sm:$0xf] %vm101, %v155
    %161 = vst.msk [vmem:[%s159 + $0x4] sm:$0xf] %vm101, %v156
    %s162 = scalar_lea.vmem [#allocation4], 16
    %v163 = vld [vmem:[%s162] sm:$0xff]
    %v164 = vpack.c.bf16 %v163, %v163
    %v166 = vsel %vm45, %v164, 0
    %168 = vmatprep.subr.bf16.mxu0 0
    %169 = vmatpush1.bf16.xpose.msra.mxu0 0
    %170 = vmatprep.subr.bf16.mxu0 0
    %171 = vmatpush1.bf16.xpose.msra.mxu0 0
    %172 = vmatprep.subr.bf16.mxu0 0
    %173 = vmatpush1.bf16.xpose.msra.mxu0 0
    %174 = vmatprep.subr.bf16.mxu0 0
    %175 = vmatpush1.bf16.xpose.msra.mxu0 0
    %176 = vmatprep.subr.bf16.mxu0 0
    %177 = vmatpush1.bf16.xpose.msra.mxu0 0
    %178 = vmatprep.subr.bf16.mxu0 0
    %179 = vmatpush1.bf16.xpose.msra.mxu0 0
    %180 = vmatprep.subr.bf16.mxu0 0
    %181 = vmatpush1.bf16.xpose.msra.mxu0 0
    %182 = vmatprep.subr.bf16.mxu0 0
    %183 = vmatpush1.bf16.xpose.msra.mxu0 %v166
    %184 = vmatprep.subr.bf16.mxu0 0
    %185 = vmatpush2.bf16.xpose.msra.mxu0 0
    %186 = vmatprep.subr.bf16.mxu0 0
    %187 = vmatpush2.bf16.xpose.msra.mxu0 0
    %188 = vmatprep.subr.bf16.mxu0 0
    %189 = vmatpush2.bf16.xpose.msra.mxu0 0
    %190 = vmatprep.subr.bf16.mxu0 0
    %191 = vmatpush2.bf16.xpose.msra.mxu0 0
    %192 = vmatprep.subr.bf16.mxu0 0
    %193 = vmatpush2.bf16.xpose.msra.mxu0 0
    %194 = vmatprep.subr.bf16.mxu0 0
    %195 = vmatpush2.bf16.xpose.msra.mxu0 0
    %196 = vmatprep.subr.bf16.mxu0 0
    %197 = vmatpush2.bf16.xpose.msra.mxu0 0
    %198 = vmatprep.subr.bf16.mxu0 0
    %199 = vmatpush2.bf16.xpose.msra.mxu0 0
    %200 = vmatprep.mubr.bf16.mxu0 0
    %201 = vmatmul.mubr.bf16.gmra.mxu0 %v47
    %v202 = vpop.f32.mrf.mxu0
    %v203 = vadd.f32 0.0, %v202
    %v204 = vpop.f32.mrf.mxu0
    %v205 = vpop.f32.mrf.mxu0
    %v206 = vadd.f32 0.0, %v205
    %v207 = vpop.f32.mrf.mxu0
    %208 = vdwg.mxu0
    %v209 = vpack.c.bf16 %v206, %v203
    %v211 = vunpack.c.l.b16 %v209
    %v212 = vunpack.c.h.b16 %v209
    %v213 = vpack.c.b16 %v211, %v211
    %v214 = vpack.c.b16 %v212, %v212
    %s217 = scalar_lea.vmem %s2, 16
    %218 = vst.msk [vmem:[%s217] sm:$0xf] %vm101, %v213
    %219 = vst.msk [vmem:[%s217 + $0x4] sm:$0xf] %vm101, %v214
    %s220 = scalar_lea.vmem [#allocation4], 24
    %v221 = vld [vmem:[%s220] sm:$0xff]
    %v222 = vpack.c.bf16 %v221, %v221
    %v224 = vsel %vm45, %v222, 0
    %226 = vmatprep.subr.bf16.mxu0 0
    %227 = vmatpush1.bf16.xpose.msra.mxu0 0
    %228 = vmatprep.subr.bf16.mxu0 0
    %229 = vmatpush1.bf16.xpose.msra.mxu0 0
    %230 = vmatprep.subr.bf16.mxu0 0
    %231 = vmatpush1.bf16.xpose.msra.mxu0 0
    %232 = vmatprep.subr.bf16.mxu0 0
    %233 = vmatpush1.bf16.xpose.msra.mxu0 0
    %234 = vmatprep.subr.bf16.mxu0 0
    %235 = vmatpush1.bf16.xpose.msra.mxu0 0
    %236 = vmatprep.subr.bf16.mxu0 0
    %237 = vmatpush1.bf16.xpose.msra.mxu0 0
    %238 = vmatprep.subr.bf16.mxu0 0
    %239 = vmatpush1.bf16.xpose.msra.mxu0 0
    %240 = vmatprep.subr.bf16.mxu0 0
    %241 = vmatpush1.bf16.xpose.msra.mxu0 %v224
    %242 = vmatprep.subr.bf16.mxu0 0
    %243 = vmatpush2.bf16.xpose.msra.mxu0 0
    %244 = vmatprep.subr.bf16.mxu0 0
    %245 = vmatpush2.bf16.xpose.msra.mxu0 0
    %246 = vmatprep.subr.bf16.mxu0 0
    %247 = vmatpush2.bf16.xpose.msra.mxu0 0
    %248 = vmatprep.subr.bf16.mxu0 0
    %249 = vmatpush2.bf16.xpose.msra.mxu0 0
    %250 = vmatprep.subr.bf16.mxu0 0
    %251 = vmatpush2.bf16.xpose.msra.mxu0 0
    %252 = vmatprep.subr.bf16.mxu0 0
    %253 = vmatpush2.bf16.xpose.msra.mxu0 0
    %254 = vmatprep.subr.bf16.mxu0 0
    %255 = vmatpush2.bf16.xpose.msra.mxu0 0
    %256 = vmatprep.subr.bf16.mxu0 0
    %257 = vmatpush2.bf16.xpose.msra.mxu0 0
    %258 = vmatprep.mubr.bf16.mxu0 0
    %259 = vmatmul.mubr.bf16.gmra.mxu0 %v47
    %v260 = vpop.f32.mrf.mxu0
    %v261 = vadd.f32 0.0, %v260
    %v262 = vpop.f32.mrf.mxu0
    %v263 = vpop.f32.mrf.mxu0
    %v264 = vadd.f32 0.0, %v263
    %v265 = vpop.f32.mrf.mxu0
    %266 = vdwg.mxu0
    %v267 = vpack.c.bf16 %v264, %v261
    %v269 = vunpack.c.l.b16 %v267
    %v270 = vunpack.c.h.b16 %v267
    %v271 = vpack.c.b16 %v269, %v269
    %v272 = vpack.c.b16 %v270, %v270
    %s275 = scalar_lea.vmem %s2, 24
    %276 = vst.msk [vmem:[%s275] sm:$0xf] %vm101, %v271
    %277 = vst.msk [vmem:[%s275 + $0x4] sm:$0xf] %vm101, %v272
    // Predicated region
    $region18: #{tpu_custom_call.1} parent=1 // pred_check
      _
    $region19: #{tpu_custom_call.1} parent=1 // pred_check_branch
      %279 = sbr.rel (0) target = $region21
    $region20: #{tpu_custom_call.1} parent=1 // pred_region
      _
    $region21: #{tpu_custom_call.1} parent=1 // pred_fallthru
      _
    // Predicated region
    $region22: #{tpu_custom_call.1} parent=1 // pred_check
      _
    $region23: #{tpu_custom_call.1} parent=1 // pred_check_branch
      %281 = sbr.rel (0) target = $region25
    $region24: #{tpu_custom_call.1} parent=1 // pred_region
      _
    $region25: #{tpu_custom_call.1} parent=1 // pred_fallthru
      _
    %282 = vsyncpa [#allocation3], 1
    %283 = vsyncpa [#allocation5], 1

</llo_original>
